<compile_context>
chip_gen: v6e
topology: v6e:2x2x1
jax: 0.10.0
libtpu: 0.0.40
codegen_flags: <defaults>
</compile_context>

<pallas_src>
import jax
import jax.numpy as jnp
from jax.experimental import pallas as pl
from jax.experimental.pallas import tpu as pltpu

# Aggregate pipelined-buffer budget.  Kept <= ~24 MiB so it fits v7x's 32 MiB
# scoped / 64 MiB physical VMEM; the explicit vmem_limit below lifts v5e's
# 16 MiB scoped default.
_VMEM_BUDGET_BYTES = 12 << 20
_VMEM_LIMIT_BYTES = 32 << 20
# Measured HBM-roofline knee: ~0.5-1 MiB blocks reach 85-86% of peak.
_TARGET_BLOCK_BYTES = 1 << 20
_MIN_STEP_BYTES = 512 << 10
_MIN_GRID_STEPS = 8

# Sublane packing per dtype width (vreg is [8,128] x 32-bit).
_SUBLANES = {1: 32, 2: 16, 4: 8, 8: 8}


def _cdiv(a, b):
    return -(-a // b)


def _round_down(x, m):
    return (x // m) * m


def _round_up(x, m):
    return _cdiv(x, m) * m


# ---------------------------------------------------------------------------
# "add" policy: elementwise sum of N tensors
# ---------------------------------------------------------------------------
def _add_kernel(*refs):
    *in_refs, out_ref = refs
    dt = in_refs[0].dtype
    # f32 accumulation for floating inputs (free on this memory-bound loop);
    # integer inputs accumulate in their own dtype (matches torch semantics).
    acc_dt = jnp.float32 if jnp.issubdtype(dt, jnp.floating) else dt
    acc = in_refs[0][...].astype(acc_dt)
    for r in in_refs[1:]:
        acc = acc + r[...].astype(acc_dt)
    out_ref[...] = acc.astype(out_ref.dtype)


def _add_budget(n_arrays):
    # Keep each double-buffered stream near the ~1 MiB sweet spot for large N,
    # but never above ~24 MiB aggregate (v7x headroom).
    return min(24 << 20, max(_VMEM_BUDGET_BYTES, 2 * n_arrays * _TARGET_BLOCK_BYTES))


def _add_tiles(rows, cols, itemsize, n_arrays, sub):
    """Pick a (tr, tc) block: fits VMEM, near the roofline knee, enough steps."""
    per_block = min(_add_budget(n_arrays) // (2 * n_arrays), _TARGET_BLOCK_BYTES)
    per_block = max(per_block, sub * 128 * itemsize)

    total = rows * cols * itemsize
    # Only force extra grid steps if each resulting block stays above the knee.
    want_steps = min(_MIN_GRID_STEPS, max(1, total // _MIN_STEP_BYTES))

    # Lane axis: keep the full (lane-dense) extent whenever a minimal
    # `sub`-row slab fits the budget; otherwise split to 128-multiples.
    if cols <= 128 or sub * cols * itemsize <= per_block:
        tc = cols
    else:
        tc = min(cols, max(128, _round_down(per_block // (sub * itemsize), 128)))

    # Sublane axis: dtype-aware alignment (8 f32 / 16 bf16 / 32 int8).
    if rows <= sub:
        tr = rows  # full-dim block is allowed below one sublane tile
    else:
        tr = min(rows, max(sub, _round_down(per_block // (tc * itemsize), sub)))
        if want_steps > 1 and rows >= want_steps * sub:
            # Guarantee grid steps along rows for pipelining / megacore sharding.
            tr = min(tr, max(sub, _round_down(rows // want_steps, sub)))

    # If rows alone can't provide the steps, split the lane axis too.
    row_steps = _cdiv(rows, tr)
    if row_steps < want_steps and tc == cols and cols > 128:
        need = _cdiv(want_steps, row_steps)
        tc_new = _round_down(cols // need, 128)
        if tc_new >= 128:
            tc = tc_new
    return tr, tc


def merge_add(xs):
    xs = list(xs)
    n = len(xs)
    if n == 1:
        return xs[0]
    shape, dtype = xs[0].shape, xs[0].dtype
    for x in xs[1:]:
        if x.shape != shape or x.dtype != dtype:
            raise ValueError("'add' merge requires identical shapes and dtypes")

    B, C, H, W = shape
    rows, cols = B * C, H * W
    xs2 = [x.reshape(rows, cols) for x in xs]  # free, lane-dense 2D view

    itemsize = jnp.dtype(dtype).itemsize
    sub = _SUBLANES.get(itemsize, 8)
    tr, tc = _add_tiles(rows, cols, itemsize, n + 1, sub)
    grid = (_cdiv(rows, tr), _cdiv(cols, tc))

    idx_map = lambda r, c: (r, c)
    block_bytes = tr * tc * itemsize
    steps = grid[0] * grid[1]
    if block_bytes < _MIN_STEP_BYTES and steps >= _MIN_GRID_STEPS:
        # Many small blocks: a 3rd input buffer hides per-stream DMA issue
        # latency (matters most at v7x's 3.2 TB/s HBM).
        in_spec = pl.BlockSpec((tr, tc), idx_map, pipeline_mode=pl.Buffered(3))
    else:
        in_spec = pl.BlockSpec((tr, tc), idx_map)
    out_spec = pl.BlockSpec((tr, tc), idx_map)

    elems = rows * cols
    cost = pl.CostEstimate(flops=(n - 1) * elems,
                           transcendentals=0,
                           bytes_accessed=(n + 1) * elems * itemsize)

    out2 = pl.pallas_call(
        _add_kernel,
        out_shape=jax.ShapeDtypeStruct((rows, cols), dtype),
        grid=grid,
        in_specs=[in_spec] * n,
        out_specs=out_spec,
        compiler_params=pltpu.CompilerParams(
            dimension_semantics=("parallel", "parallel"),
            vmem_limit_bytes=_VMEM_LIMIT_BYTES),
        cost_estimate=cost,
    )(*xs2)
    return out2.reshape(shape)


# ---------------------------------------------------------------------------
# "cat" policy: concat along channel dim (axis=1)
# ---------------------------------------------------------------------------
def _make_cat_kernel(n, C):
    def kernel(*refs):
        *in_refs, out_ref = refs
        for i, r in enumerate(in_refs):
            out_ref[:, i * C:(i + 1) * C, :] = r[...]
    return kernel


def _cat_tile_hw(C, hw, itemsize, n, sub, batch):
    """Pick tile along H*W for (1,C,t) inputs / (1,N*C,t) output blocks."""
    pad_c = _round_up(max(C, 1), sub)
    pad_out = _round_up(n * C, sub)
    # Double-buffered, sublane-PADDED VMEM bytes per column of H*W.
    bytes_per_col = 2 * (n * pad_c + pad_out) * itemsize
    min_tile = hw if hw <= 128 else 128
    if bytes_per_col * min_tile > _VMEM_BUDGET_BYTES:
        return None  # even the minimal tile blows VMEM -> XLA concat fallback

    max_cols = _VMEM_BUDGET_BYTES // bytes_per_col
    # Keep the output block (the biggest stream) near the roofline knee.
    target_cols = max(min_tile, _TARGET_BLOCK_BYTES // max(1, pad_out * itemsize))
    cols = min(max_cols, target_cols)

    # Minimum grid steps for pipelining / v7x megacore, but only if each
    # resulting step stays reasonably sized.
    total_bytes = 2 * batch * n * C * hw * itemsize
    want_steps = min(_MIN_GRID_STEPS, max(1, total_bytes // _MIN_STEP_BYTES))
    want_hw_steps = _cdiv(want_steps, max(1, batch))
    if want_hw_steps > 1 and hw >= want_hw_steps * 128:
        cols = min(cols, max(128, _round_down(hw // want_hw_steps, 128)))

    if cols >= hw:
        return hw
    return max(128, _round_down(cols, 128))


def merge_cat(xs):
    xs = list(xs)
    n = len(xs)
    if n == 1:
        return xs[0]
    B, C, H, W = xs[0].shape
    dtype = xs[0].dtype
    for x in xs[1:]:
        if x.dtype != dtype or x.shape[0] != B or x.shape[2:] != (H, W):
            raise ValueError("'cat' merge requires matching batch/spatial dims and dtype")
    if any(x.shape[1] != C for x in xs[1:]):
        # Ragged channel counts: plain XLA concat already reads/writes once.
        return jnp.concatenate(xs, axis=1)

    hw = H * W
    itemsize = jnp.dtype(dtype).itemsize
    sub = _SUBLANES.get(itemsize, 8)
    tile = _cat_tile_hw(C, hw, itemsize, n, sub, B)
    if tile is None:
        return jnp.concatenate(xs, axis=1)

    # Channels on the sublane axis -> dense, full-width loads/stores.
    xs3 = [x.reshape(B, C, hw) for x in xs]  # free 3D views
    grid = (B, _cdiv(hw, tile))

    in_spec = pl.BlockSpec((1, C, tile), lambda b, t: (b, 0, t))
    out_spec = pl.BlockSpec((1, n * C, tile), lambda b, t: (b, 0, t))

    total_elems = B * n * C * hw
    cost = pl.CostEstimate(flops=0, transcendentals=0,
                           bytes_accessed=2 * total_elems * itemsize)

    out3 = pl.pallas_call(
        _make_cat_kernel(n, C),
        out_shape=jax.ShapeDtypeStruct((B, n * C, hw), dtype),
        grid=grid,
        in_specs=[in_spec] * n,
        out_specs=out_spec,
        compiler_params=pltpu.CompilerParams(
            dimension_semantics=("parallel", "parallel"),
            vmem_limit_bytes=_VMEM_LIMIT_BYTES),
        cost_estimate=cost,
    )(*xs3)
    # (B, N*C, H*W) -> (B, N*C, H, W) == torch.cat(x, dim=1)
    return out3.reshape(B, n * C, H, W)


# ---------------------------------------------------------------------------
# Module wrapper mirroring the PyTorch MergeBlock
# ---------------------------------------------------------------------------
class MergeBlock:
    def __init__(self, policy, min_pallas_elements=1 << 16):
        if policy not in ["add", "cat"]:
            raise ValueError(
                "`merge_policy` must be one of: ['add', 'cat'], got {}".format(policy))
        self.policy = policy
        # Below this total element count, plain XLA ops win (pallas launch +
        # ~0.35us per grid step dominates KB-sized tensors). 0 forces Pallas.
        # For a standalone 'cat' with no adjacent fusion XLA's concatenate is
        # already a single-pass copy, so raising this for 'cat' is reasonable.
        self.min_pallas_elements = min_pallas_elements

    def __call__(self, x):
        xs = list(x)
        if self.policy == "add":
            if int(xs[0].size) >= self.min_pallas_elements:
                return merge_add(xs)
            out = xs[0]
            for v in xs[1:]:
                out = out + v
            return out
        elif self.policy == "cat":
            if sum(int(v.size) for v in xs) >= self.min_pallas_elements:
                return merge_cat(xs)
            return jnp.concatenate(xs, axis=1)
        else:
            raise ValueError(
                "`merge_policy` must be one of: ['add', 'cat'], got {}".format(self.policy))


if __name__ == "__main__":
    key = jax.random.PRNGKey(0)
    keys = jax.random.split(key, 4)
    # 4 pyramid feature maps, NCHW = (2, 4, 16, 16) each
    xs = [jax.random.normal(k, (2, 4, 16, 16), dtype=jnp.float32) for k in keys]

    # Force the Pallas path for this small demo (threshold 0).
    add_out = MergeBlock("add", min_pallas_elements=0)(xs)
    cat_out = MergeBlock("cat", min_pallas_elements=0)(xs)
    jax.block_until_ready((add_out, cat_out))

    # reference semantics (torch: sum(x) / torch.cat(x, dim=1))
    ref_add = xs[0] + xs[1] + xs[2] + xs[3]
    ref_cat = jnp.concatenate(xs, axis=1)

    assert add_out.shape == (2, 4, 16, 16)
    assert cat_out.shape == (2, 16, 16, 16)
    assert jnp.allclose(add_out, ref_add, atol=1e-6)
    assert jnp.array_equal(cat_out, ref_cat)

    print("KERNEL_OK")
</pallas_src>

<mosaic_0001>
module attributes {stable_mosaic.version = 11 : i64} {
  func.func @_add_kernel(%arg0: i32, %arg1: i32, %arg2: memref<8x256xf32, #tpu.memory_space<vmem>>, %arg3: memref<8x256xf32, #tpu.memory_space<vmem>>, %arg4: memref<8x256xf32, #tpu.memory_space<vmem>>, %arg5: memref<8x256xf32, #tpu.memory_space<vmem>>, %arg6: memref<8x256xf32, #tpu.memory_space<vmem>>) attributes {dimension_semantics = [#tpu.dimension_semantics<parallel>, #tpu.dimension_semantics<parallel>], iteration_bounds = array<i64: 1, 1>, scalar_prefetch = 0 : i64, scratch_operands = 0 : i64, tpu.core_type = #tpu.core_type<tc>, window_params = [{transform_indices = @transform_0, window_bounds = array<i64: 8, 256>}, {transform_indices = @transform_1, window_bounds = array<i64: 8, 256>}, {transform_indices = @transform_2, window_bounds = array<i64: 8, 256>}, {transform_indices = @transform_3, window_bounds = array<i64: 8, 256>}, {transform_indices = @transform_4, window_bounds = array<i64: 8, 256>}]} {
    %c0 = arith.constant 0 : index
    %c0_0 = arith.constant 0 : index
    %0 = vector.load %arg2[%c0, %c0_0] : memref<8x256xf32, #tpu.memory_space<vmem>>, vector<8x256xf32>
    %c0_1 = arith.constant 0 : index
    %c0_2 = arith.constant 0 : index
    %1 = vector.load %arg3[%c0_1, %c0_2] : memref<8x256xf32, #tpu.memory_space<vmem>>, vector<8x256xf32>
    %2 = arith.addf %0, %1 : vector<8x256xf32>
    %c0_3 = arith.constant 0 : index
    %c0_4 = arith.constant 0 : index
    %3 = vector.load %arg4[%c0_3, %c0_4] : memref<8x256xf32, #tpu.memory_space<vmem>>, vector<8x256xf32>
    %4 = arith.addf %2, %3 : vector<8x256xf32>
    %c0_5 = arith.constant 0 : index
    %c0_6 = arith.constant 0 : index
    %5 = vector.load %arg5[%c0_5, %c0_6] : memref<8x256xf32, #tpu.memory_space<vmem>>, vector<8x256xf32>
    %6 = arith.addf %4, %5 : vector<8x256xf32>
    %c0_7 = arith.constant 0 : index
    %c0_8 = arith.constant 0 : index
    %7 = vector.load %arg6[%c0_7, %c0_8] : memref<8x256xf32, #tpu.memory_space<vmem>>, vector<8x256xf32>
    tpu.vector_store %arg6[%c0_7, %c0_8], %6 {strides = array<i32>} : memref<8x256xf32, #tpu.memory_space<vmem>>, vector<8x256xf32>,
    return
  }
  func.func @transform_0(%arg0: i32, %arg1: i32) -> (i32, i32) {
    %c0_i32 = arith.constant 0 : i32
    return %arg0, %arg1 : i32, i32
  }
  func.func @transform_1(%arg0: i32, %arg1: i32) -> (i32, i32) {
    %c0_i32 = arith.constant 0 : i32
    return %arg0, %arg1 : i32, i32
  }
  func.func @transform_2(%arg0: i32, %arg1: i32) -> (i32, i32) {
    %c0_i32 = arith.constant 0 : i32
    return %arg0, %arg1 : i32, i32
  }
  func.func @transform_3(%arg0: i32, %arg1: i32) -> (i32, i32) {
    %c0_i32 = arith.constant 0 : i32
    return %arg0, %arg1 : i32, i32
  }
  func.func @transform_4(%arg0: i32, %arg1: i32) -> (i32, i32) {
    %c0_i32 = arith.constant 0 : i32
    return %arg0, %arg1 : i32, i32
  }
}

</mosaic_0001>

<llo_original>
// kernel: tpu_custom_call.1
$region0: #{tpu_custom_call.1}
  #allocation0 [shape = 'u32[]', space=smem, size = 0x4, offset = 0x4, fixed_abs, tag = 'smem constant byte address 0x4 - core index']
  #allocation1 [shape = 'u32[144,128]{1,0:T(1,128)}', space=vmem, size = 0x12000, scoped, tag = 'internal scratch']
  %s0 = inlined_call_operand.hbm [shape: f32[8,256], index: 0, kind: input, shape index: {}]
  %s1 = inlined_call_operand.hbm [shape: f32[8,256], index: 1, kind: input, shape index: {}]
  %s2 = inlined_call_operand.hbm [shape: f32[8,256], index: 2, kind: input, shape index: {}]
  %s3 = inlined_call_operand.hbm [shape: f32[8,256], index: 3, kind: input, shape index: {}]
  %s4 = inlined_call_operand.hbm [shape: f32[8,256], index: 4, kind: output, shape index: {}]
  %s5 = sld [smem:[#allocation0]]
  $region42: #{tpu_custom_call.1} parent=0
    _
  %s7 = ssub.s32 1, %s5
  %s8 = scalar_select 0, %s7, %s5
  $region1: #{tpu_custom_call.1} parent=0
    #allocation2 [shape = 'u8[8192]{0}', space=vmem, size = 0x2000, scoped, tag = 'input window, operand 0, single buffered']
    #allocation3 [shape = 's32[1]{0}', space=sflag, size = 0x4, scoped, tag = 'scoped memory for tpu_custom_call.1']
    #allocation4 [shape = 's32[1]{0}', space=sflag, size = 0x4, scoped, tag = 'scoped memory for tpu_custom_call.1']
    #allocation5 [shape = 'u8[8192]{0}', space=vmem, size = 0x2000, scoped, tag = 'input window, operand 1, single buffered']
    #allocation6 [shape = 's32[1]{0}', space=sflag, size = 0x4, scoped, tag = 'scoped memory for tpu_custom_call.1']
    #allocation7 [shape = 'u8[8192]{0}', space=vmem, size = 0x2000, scoped, tag = 'input window, operand 2, single buffered']
    #allocation8 [shape = 'u8[8192]{0}', space=vmem, size = 0x2000, scoped, tag = 'input window, operand 3, single buffered']
    #allocation9 [shape = 's32[1]{0}', space=sflag, size = 0x4, scoped, tag = 'scoped memory for tpu_custom_call.1']
    #allocation10 [shape = 'u8[8192]{0}', space=vmem, size = 0x2000, scoped, tag = 'output window, operand 0, single buffered']
    %9 = vsyncpa [#allocation3], 0
    %10 = vsyncpa [#allocation6], 0
    %11 = vsyncpa [#allocation9], 0
    %12 = vsyncpa [#allocation4], 0
    // Predicated region
    $region2: #{tpu_custom_call.1} parent=1 // pred_check
      _
    $region3: #{tpu_custom_call.1} parent=1 // pred_check_branch
      %14 = sbr.rel (0) target = $region5
    $region4: #{tpu_custom_call.1} parent=1 // pred_region
      %s16 = ssub.s32 256, 256
      %17 = vsyncadd [#allocation3], %s16
      %s19 = sshll.u32 [#allocation2], 4
      %s20 = int_to_ptr.vmem [resolvable:$true] %s19
      %22 = dma.hbm_to_vmem [thread:$0]  %s0, 256, %s20, [#allocation3]
    $region5: #{tpu_custom_call.1} parent=1 // pred_fallthru
      _
    // Predicated region
    $region6: #{tpu_custom_call.1} parent=1 // pred_check
      _
    $region7: #{tpu_custom_call.1} parent=1 // pred_check_branch
      %24 = sbr.rel (0) target = $region9
    $region8: #{tpu_custom_call.1} parent=1 // pred_region
      %s26 = ssub.s32 256, 256
      %27 = vsyncadd [#allocation6], %s26
      %s29 = sshll.u32 [#allocation5], 4
      %s30 = int_to_ptr.vmem [resolvable:$true] %s29
      %32 = dma.hbm_to_vmem [thread:$0]  %s1, 256, %s30, [#allocation6]
    $region9: #{tpu_custom_call.1} parent=1 // pred_fallthru
      _
    // Predicated region
    $region10: #{tpu_custom_call.1} parent=1 // pred_check
      _
    $region11: #{tpu_custom_call.1} parent=1 // pred_check_branch
      %34 = sbr.rel (0) target = $region13
    $region12: #{tpu_custom_call.1} parent=1 // pred_region
      %s36 = ssub.s32 256, 256
      %37 = vsyncadd [#allocation6], %s36
      %s39 = sshll.u32 [#allocation7], 4
      %s40 = int_to_ptr.vmem [resolvable:$true] %s39
      %42 = dma.hbm_to_vmem [thread:$0]  %s2, 256, %s40, [#allocation6]
    $region13: #{tpu_custom_call.1} parent=1 // pred_fallthru
      _
    // Predicated region
    $region14: #{tpu_custom_call.1} parent=1 // pred_check
      _
    $region15: #{tpu_custom_call.1} parent=1 // pred_check_branch
      %44 = sbr.rel (0) target = $region17
    $region16: #{tpu_custom_call.1} parent=1 // pred_region
      %s46 = ssub.s32 256, 256
      %47 = vsyncadd [#allocation9], %s46
      %s49 = sshll.u32 [#allocation8], 4
      %s50 = int_to_ptr.vmem [resolvable:$true] %s49
      %52 = dma.hbm_to_vmem [thread:$0]  %s3, 256, %s50, [#allocation9]
    $region17: #{tpu_custom_call.1} parent=1 // pred_fallthru
      _
    // Predicated region
    $region18: #{tpu_custom_call.1} parent=1 // pred_check
      _
    $region19: #{tpu_custom_call.1} parent=1 // pred_check_branch
      %54 = sbr.rel (0) target = $region21
    $region20: #{tpu_custom_call.1} parent=1 // pred_region
      %55 = dma.done [#allocation3], 256
    $region21: #{tpu_custom_call.1} parent=1 // pred_fallthru
      _
    // Predicated region
    $region22: #{tpu_custom_call.1} parent=1 // pred_check
      _
    $region23: #{tpu_custom_call.1} parent=1 // pred_check_branch
      %57 = sbr.rel (0) target = $region25
    $region24: #{tpu_custom_call.1} parent=1 // pred_region
      %58 = dma.done [#allocation6], 256
    $region25: #{tpu_custom_call.1} parent=1 // pred_fallthru
      _
    // Predicated region
    $region26: #{tpu_custom_call.1} parent=1 // pred_check
      _
    $region27: #{tpu_custom_call.1} parent=1 // pred_check_branch
      %60 = sbr.rel (0) target = $region29
    $region28: #{tpu_custom_call.1} parent=1 // pred_region
      %61 = dma.done [#allocation6], 256
    $region29: #{tpu_custom_call.1} parent=1 // pred_fallthru
      _
    // Predicated region
    $region30: #{tpu_custom_call.1} parent=1 // pred_check
      _
    $region31: #{tpu_custom_call.1} parent=1 // pred_check_branch
      %63 = sbr.rel (0) target = $region33
    $region32: #{tpu_custom_call.1} parent=1 // pred_region
      %64 = dma.done [#allocation9], 256
    $region33: #{tpu_custom_call.1} parent=1 // pred_fallthru
      _
    %v65 = vld [vmem:[#allocation2] sm:$0xff]
    %v66 = vld [vmem:[#allocation2 + $0x8] sm:$0xff]
    %v67 = vld [vmem:[#allocation5] sm:$0xff]
    %v68 = vld [vmem:[#allocation5 + $0x8] sm:$0xff]
    %v69 = vadd.f32 %v65, %v67
    %v70 = vadd.f32 %v66, %v68
    %v71 = vld [vmem:[#allocation7] sm:$0xff]
    %v72 = vld [vmem:[#allocation7 + $0x8] sm:$0xff]
    %v73 = vadd.f32 %v69, %v71
    %v74 = vadd.f32 %v70, %v72
    %v75 = vld [vmem:[#allocation8] sm:$0xff]
    %v76 = vld [vmem:[#allocation8 + $0x8] sm:$0xff]
    %v77 = vadd.f32 %v73, %v75
    %v78 = vadd.f32 %v74, %v76
    %79 = vst [vmem:[#allocation10] sm:$0xff] %v77
    %80 = vst [vmem:[#allocation10 + $0x8] sm:$0xff] %v78
    // Predicated region
    $region34: #{tpu_custom_call.1} parent=1 // pred_check
      _
    $region35: #{tpu_custom_call.1} parent=1 // pred_check_branch
      %82 = sbr.rel (0) target = $region37
    $region36: #{tpu_custom_call.1} parent=1 // pred_region
      %s84 = ssub.s32 256, 256
      %85 = vsyncadd [#allocation4], %s84
      %s87 = sshll.u32 [#allocation10], 4
      %s88 = int_to_ptr.vmem [resolvable:$true] %s87
      %90 = dma.vmem_to_hbm [thread:$0]  %s88, 256, %s4, [#allocation4]
    $region37: #{tpu_custom_call.1} parent=1 // pred_fallthru
      _
    // Predicated region
    $region38: #{tpu_custom_call.1} parent=1 // pred_check
      _
    $region39: #{tpu_custom_call.1} parent=1 // pred_check_branch
      %92 = sbr.rel (0) target = $region41
    $region40: #{tpu_custom_call.1} parent=1 // pred_region
      %93 = dma.done [#allocation4], 256
    $region41: #{tpu_custom_call.1} parent=1 // pred_fallthru
      _
    %94 = vsyncpa [#allocation3], 1
    %95 = vsyncpa [#allocation6], 1
    %96 = vsyncpa [#allocation9], 1
    %97 = vsyncpa [#allocation4], 1

</llo_original>
